<compile_context>
chip_gen: v5e
topology: v5e:2x2
jax: 0.10.0
libtpu: 0.0.40
codegen_flags: <defaults>
</compile_context>

<pallas_src>
import functools

import jax
import jax.numpy as jnp
from jax.experimental import pallas as pl
from jax.experimental.pallas import tpu as pltpu

EPS = 0.1      # LayerNorm eps from the module __init__
LANES = 128    # TPU lane width; all feature axes padded to this


# --------------------------------------------------------------------------
# Kernel
# --------------------------------------------------------------------------
def encoder_kernel(x_ref, w_ref, vec_ref, out_ref, *, hidden_dim, eps):
    """Fused Encoder forward; everything resident in VMEM.

    x_ref   : (Bt, 128) f32       input rows, zero-padded past input_dim
    w_ref   : (6, 128, 128) bf16  fc1..fc5 and fused [mu|logvar] weights
    vec_ref : (16, 128) f32       rows 0-5 biases (b1..b5, b_out),
                                  rows 6-10 gammas, rows 11-15 betas
    out_ref : (Bt, 128) f32       [ mu | logvar | zero padding ]
    """
    P = x_ref.shape[-1]
    inv_h = 1.0 / float(hidden_dim)

    x = x_ref[...]
    vec = vec_ref[...]

    # Lane mask marking the real hidden features (hoisted, computed once).
    lane = jax.lax.broadcasted_iota(jnp.int32, (1, P), 1)
    mask = (lane < hidden_dim).astype(jnp.float32)

    # L2 row normalization: rsqrt goes to the EUP (no dependent sqrt+divide).
    x = x * jax.lax.rsqrt(jnp.sum(x * x, axis=-1, keepdims=True))
    # TODO(synk): F.dropout is identity in eval mode; training-mode dropout
    # (random masking) is not implemented in this kernel.

    def dense(h, layer):
        # bf16 inputs for the MXU, f32 accumulation; bias is vec row `layer`.
        return (jnp.dot(h.astype(jnp.bfloat16), w_ref[layer],
                        preferred_element_type=jnp.float32)
                + vec[layer:layer + 1, :])

    def layernorm(a, layer):
        gamma = vec[6 + layer:7 + layer, :]
        beta = vec[11 + layer:12 + layer, :]
        mean = jnp.sum(a, axis=-1, keepdims=True) * inv_h   # pad lanes are 0
        c = (a - mean) * mask                               # zero padded lanes
        var = jnp.sum(c * c, axis=-1, keepdims=True) * inv_h
        return c * jax.lax.rsqrt(var + eps) * gamma + beta  # gamma/beta pad = 0

    def swish(v):
        return v * jax.nn.sigmoid(v)

    # fc1 (no residual), then fc2..fc5 with a running residual accumulator.
    h = layernorm(swish(dense(x, 0)), 0)
    acc = h
    for layer in range(1, 5):
        h = layernorm(swish(dense(h, layer) + acc), layer)
        acc = acc + h

    # Fused mu|logvar projection -> single lane-dense store.
    out_ref[...] = dense(h, 5)


# --------------------------------------------------------------------------
# Parameter construction / packing
# --------------------------------------------------------------------------
def init_params(key, input_dim, hidden_dim, latent_dim):
    """Deterministic synthetic parameters (PyTorch-like fan-in scaling)."""
    keys = jax.random.split(key, 14)
    params = []

    def linear(kw, kb, fan_in, fan_out):
        bound = 1.0 / jnp.sqrt(fan_in)
        w = jax.random.uniform(kw, (fan_in, fan_out), jnp.float32, -bound, bound)
        b = jax.random.uniform(kb, (1, fan_out), jnp.float32, -bound, bound)
        return w, b

    dims_in = [input_dim] + [hidden_dim] * 4
    for i in range(5):  # fc1..fc5 each followed by a LayerNorm
        w, b = linear(keys[2 * i], keys[2 * i + 1], dims_in[i], hidden_dim)
        gamma = jnp.ones((1, hidden_dim), jnp.float32)   # nn.LayerNorm defaults
        beta = jnp.zeros((1, hidden_dim), jnp.float32)
        params += [w, b, gamma, beta]

    wmu, bmu = linear(keys[10], keys[11], hidden_dim, latent_dim)
    wlv, blv = linear(keys[12], keys[13], hidden_dim, latent_dim)
    params += [wmu, bmu, wlv, blv]
    return params


def pack_params(params, lanes=LANES):
    """Coalesce the 24 parameter tensors into two padded stacked arrays."""
    ws, bs, gs, bes = [], [], [], []
    for i in range(5):
        w, b, g, be = params[4 * i:4 * i + 4]
        ws.append(w); bs.append(b); gs.append(g); bes.append(be)
    wmu, bmu, wlv, blv = params[20:]
    ws.append(jnp.concatenate([wmu, wlv], axis=1))          # fused [mu|logvar]
    b_out = jnp.concatenate([bmu, blv], axis=1)

    def pad_w(w):
        assert w.shape[0] <= lanes and w.shape[1] <= lanes
        out = jnp.zeros((lanes, lanes), jnp.float32)
        return out.at[:w.shape[0], :w.shape[1]].set(w)

    def pad_v(v):
        assert v.shape[1] <= lanes
        return jnp.zeros((lanes,), jnp.float32).at[:v.shape[1]].set(v[0])

    w_stack = jnp.stack([pad_w(w) for w in ws]).astype(jnp.bfloat16)     # (6,P,P)
    vec_stack = jnp.stack([pad_v(v) for v in bs + [b_out] + gs + bes])   # (16,P)
    return w_stack, vec_stack


# --------------------------------------------------------------------------
# Wrapper
# --------------------------------------------------------------------------
def encoder_forward(x, params, hidden_dim, latent_dim):
    batch, input_dim = x.shape
    P = LANES
    assert input_dim <= P and hidden_dim <= P and 2 * latent_dim <= P

    w_stack, vec_stack = pack_params(params)

    # Batch tiling: pad to a sublane multiple; tile large batches so the grid
    # can shard across TensorCores while weights stay VMEM-resident.
    block_b = min(max(8, pl.cdiv(batch, 8) * 8), 256)
    b_pad = pl.cdiv(batch, block_b) * block_b

    xp = jnp.zeros((b_pad, P), jnp.float32).at[:batch, :input_dim].set(x)
    if b_pad > batch:
        # Keep padded rows finite through the (eps-free) L2 normalization.
        xp = xp.at[batch:, 0].set(1.0)

    kernel = functools.partial(encoder_kernel, hidden_dim=hidden_dim, eps=EPS)
    out = pl.pallas_call(
        kernel,
        out_shape=jax.ShapeDtypeStruct((b_pad, P), jnp.float32),
        grid=(b_pad // block_b,),
        in_specs=[
            pl.BlockSpec((block_b, P), lambda i: (i, 0)),    # activations
            pl.BlockSpec((6, P, P), lambda i: (0, 0, 0)),    # weights (resident)
            pl.BlockSpec((16, P), lambda i: (0, 0)),         # bias/gamma/beta slab
        ],
        out_specs=pl.BlockSpec((block_b, P), lambda i: (i, 0)),
        compiler_params=pltpu.CompilerParams(
            dimension_semantics=("parallel",)),
    )(xp, w_stack, vec_stack)

    mu = out[:batch, :latent_dim]
    logvar = out[:batch, latent_dim:2 * latent_dim]
    return mu, logvar


# --------------------------------------------------------------------------
# Pure-JAX (f32) reference for sanity checking
# --------------------------------------------------------------------------
def _swish(v):
    return v * jax.nn.sigmoid(v)


def _layernorm(v, gamma, beta):
    m = jnp.mean(v, axis=-1, keepdims=True)
    c = v - m
    var = jnp.mean(c * c, axis=-1, keepdims=True)
    return c * jax.lax.rsqrt(var + EPS) * gamma + beta


def reference_forward(x, params):
    x = x / jnp.sqrt(jnp.sum(x * x, axis=-1, keepdims=True))
    hs = []
    h = x
    for i in range(5):
        w, b, g, be = params[4 * i:4 * i + 4]
        pre = h @ w + b + sum(hs)
        h = _layernorm(_swish(pre), g, be)
        hs.append(h)
    wmu, bmu, wlv, blv = params[20:]
    return h @ wmu + bmu, h @ wlv + blv


if __name__ == "__main__":
    batch, input_dim, hidden_dim, latent_dim = 8, 64, 32, 16

    key = jax.random.PRNGKey(0)
    kx, kp = jax.random.split(key)
    x = jax.random.normal(kx, (batch, input_dim), jnp.float32)
    params = init_params(kp, input_dim, hidden_dim, latent_dim)

    mu, logvar = encoder_forward(x, params, hidden_dim, latent_dim)
    jax.block_until_ready((mu, logvar))

    mu_ref, logvar_ref = reference_forward(x, params)
    # bf16 MXU inputs -> relaxed tolerance vs. the pure-f32 reference.
    assert jnp.allclose(mu, mu_ref, atol=5e-2, rtol=5e-2), (
        float(jnp.max(jnp.abs(mu - mu_ref))))
    assert jnp.allclose(logvar, logvar_ref, atol=5e-2, rtol=5e-2), (
        float(jnp.max(jnp.abs(logvar - logvar_ref))))

    print("KERNEL_OK")
</pallas_src>

<mosaic_0001>
module attributes {stable_mosaic.version = 11 : i64} {
  func.func @encoder_kernel(%arg0: i32, %arg1: memref<8x128xf32, #tpu.memory_space<vmem>>, %arg2: memref<6x128x128xbf16, #tpu.memory_space<vmem>>, %arg3: memref<16x128xf32, #tpu.memory_space<vmem>>, %arg4: memref<8x128xf32, #tpu.memory_space<vmem>>) attributes {dimension_semantics = [#tpu.dimension_semantics<parallel>], iteration_bounds = array<i64: 1>, scalar_prefetch = 0 : i64, scratch_operands = 0 : i64, tpu.core_type = #tpu.core_type<tc>, window_params = [{transform_indices = @transform_0, window_bounds = array<i64: 8, 128>}, {pipeline_mode = #tpu.pipeline_mode<synchronous>, transform_indices = @transform_1, window_bounds = array<i64: 6, 128, 128>}, {pipeline_mode = #tpu.pipeline_mode<synchronous>, transform_indices = @transform_2, window_bounds = array<i64: 16, 128>}, {transform_indices = @transform_3, window_bounds = array<i64: 8, 128>}]} {
    %c0 = arith.constant 0 : index
    %c0_0 = arith.constant 0 : index
    %0 = vector.load %arg1[%c0, %c0_0] : memref<8x128xf32, #tpu.memory_space<vmem>>, vector<8x128xf32>
    %c0_1 = arith.constant 0 : index
    %c0_2 = arith.constant 0 : index
    %1 = vector.load %arg3[%c0_1, %c0_2] : memref<16x128xf32, #tpu.memory_space<vmem>>, vector<16x128xf32>
    %2 = tpu.iota {dimensions = array<i32: 1>} : vector<1x128xi32>
    %c32_i32 = arith.constant 32 : i32
    %3 = vector.broadcast %c32_i32 : i32 to vector<1x128xi32>
    %4 = arith.cmpi slt, %2, %3 : vector<1x128xi32>
    %5 = arith.extui %4 : vector<1x128xi1> to vector<1x128xi32>
    %6 = arith.sitofp %5 : vector<1x128xi32> to vector<1x128xf32>
    %7 = arith.mulf %0, %0 : vector<8x128xf32>
    %cst = arith.constant dense<0.000000e+00> : vector<8xf32>
    %8 = vector.multi_reduction <add>, %7, %cst [1] : vector<8x128xf32> to vector<8xf32>
    %9 = vector.shape_cast %8 : vector<8xf32> to vector<8x1xf32>
    %10 = math.rsqrt %9 : vector<8x1xf32>
    %11 = vector.broadcast %10 : vector<8x1xf32> to vector<8x128xf32>
    %12 = arith.mulf %0, %11 : vector<8x128xf32>
    %13 = arith.truncf %12 : vector<8x128xf32> to vector<8x128xbf16>
    %c0_3 = arith.constant 0 : index
    %c0_4 = arith.constant 0 : index
    %c0_5 = arith.constant 0 : index
    %14 = vector.load %arg2[%c0_3, %c0_4, %c0_5] : memref<6x128x128xbf16, #tpu.memory_space<vmem>>, vector<1x128x128xbf16>
    %15 = vector.shape_cast %14 : vector<1x128x128xbf16> to vector<128x128xbf16>
    %cst_6 = arith.constant dense<0.000000e+00> : vector<8x128xf32>
    %16 = tpu.matmul %13, %15, %cst_6 {dimension_numbers = #tpu.dot_dimension_numbers<[1], [0], [0], [1], [0, 0, 1, 1], [], []>} : vector<8x128xbf16>, vector<128x128xbf16>, vector<8x128xf32> -> vector<8x128xf32>
    %17 = vector.extract_strided_slice %1 {offsets = [0, 0], sizes = [1, 128], strides = [1, 1]} : vector<16x128xf32> to vector<1x128xf32>
    %18 = vector.broadcast %17 : vector<1x128xf32> to vector<8x128xf32>
    %19 = arith.addf %16, %18 : vector<8x128xf32>
    %20 = arith.negf %19 : vector<8x128xf32>
    %21 = math.exp %20 : vector<8x128xf32>
    %cst_7 = arith.constant 1.000000e+00 : f32
    %22 = vector.broadcast %cst_7 : f32 to vector<8x128xf32>
    %23 = arith.addf %22, %21 : vector<8x128xf32>
    %24 = arith.divf %22, %23 : vector<8x128xf32>
    %25 = arith.mulf %19, %24 : vector<8x128xf32>
    %26 = vector.extract_strided_slice %1 {offsets = [6, 0], sizes = [1, 128], strides = [1, 1]} : vector<16x128xf32> to vector<1x128xf32>
    %27 = vector.extract_strided_slice %1 {offsets = [11, 0], sizes = [1, 128], strides = [1, 1]} : vector<16x128xf32> to vector<1x128xf32>
    %cst_8 = arith.constant dense<0.000000e+00> : vector<8xf32>
    %28 = vector.multi_reduction <add>, %25, %cst_8 [1] : vector<8x128xf32> to vector<8xf32>
    %29 = vector.shape_cast %28 : vector<8xf32> to vector<8x1xf32>
    %cst_9 = arith.constant 3.125000e-02 : f32
    %30 = vector.broadcast %cst_9 : f32 to vector<8x1xf32>
    %31 = arith.mulf %29, %30 : vector<8x1xf32>
    %32 = vector.broadcast %31 : vector<8x1xf32> to vector<8x128xf32>
    %33 = arith.subf %25, %32 : vector<8x128xf32>
    %34 = vector.broadcast %6 : vector<1x128xf32> to vector<8x128xf32>
    %35 = arith.mulf %33, %34 : vector<8x128xf32>
    %36 = arith.mulf %35, %35 : vector<8x128xf32>
    %cst_10 = arith.constant dense<0.000000e+00> : vector<8xf32>
    %37 = vector.multi_reduction <add>, %36, %cst_10 [1] : vector<8x128xf32> to vector<8xf32>
    %38 = vector.shape_cast %37 : vector<8xf32> to vector<8x1xf32>
    %cst_11 = arith.constant 3.125000e-02 : f32
    %39 = vector.broadcast %cst_11 : f32 to vector<8x1xf32>
    %40 = arith.mulf %38, %39 : vector<8x1xf32>
    %cst_12 = arith.constant 1.000000e-01 : f32
    %41 = vector.broadcast %cst_12 : f32 to vector<8x1xf32>
    %42 = arith.addf %40, %41 : vector<8x1xf32>
    %43 = math.rsqrt %42 : vector<8x1xf32>
    %44 = vector.broadcast %43 : vector<8x1xf32> to vector<8x128xf32>
    %45 = arith.mulf %35, %44 : vector<8x128xf32>
    %46 = vector.broadcast %26 : vector<1x128xf32> to vector<8x128xf32>
    %47 = arith.mulf %45, %46 : vector<8x128xf32>
    %48 = vector.broadcast %27 : vector<1x128xf32> to vector<8x128xf32>
    %49 = arith.addf %47, %48 : vector<8x128xf32>
    %50 = arith.truncf %49 : vector<8x128xf32> to vector<8x128xbf16>
    %c1 = arith.constant 1 : index
    %c0_13 = arith.constant 0 : index
    %c0_14 = arith.constant 0 : index
    %51 = vector.load %arg2[%c1, %c0_13, %c0_14] : memref<6x128x128xbf16, #tpu.memory_space<vmem>>, vector<1x128x128xbf16>
    %52 = vector.shape_cast %51 : vector<1x128x128xbf16> to vector<128x128xbf16>
    %cst_15 = arith.constant dense<0.000000e+00> : vector<8x128xf32>
    %53 = tpu.matmul %50, %52, %cst_15 {dimension_numbers = #tpu.dot_dimension_numbers<[1], [0], [0], [1], [0, 0, 1, 1], [], []>} : vector<8x128xbf16>, vector<128x128xbf16>, vector<8x128xf32> -> vector<8x128xf32>
    %54 = vector.extract_strided_slice %1 {offsets = [1, 0], sizes = [1, 128], strides = [1, 1]} : vector<16x128xf32> to vector<1x128xf32>
    %55 = vector.broadcast %54 : vector<1x128xf32> to vector<8x128xf32>
    %56 = arith.addf %53, %55 : vector<8x128xf32>
    %57 = arith.addf %56, %49 : vector<8x128xf32>
    %58 = arith.negf %57 : vector<8x128xf32>
    %59 = math.exp %58 : vector<8x128xf32>
    %cst_16 = arith.constant 1.000000e+00 : f32
    %60 = vector.broadcast %cst_16 : f32 to vector<8x128xf32>
    %61 = arith.addf %60, %59 : vector<8x128xf32>
    %62 = arith.divf %60, %61 : vector<8x128xf32>
    %63 = arith.mulf %57, %62 : vector<8x128xf32>
    %64 = vector.extract_strided_slice %1 {offsets = [7, 0], sizes = [1, 128], strides = [1, 1]} : vector<16x128xf32> to vector<1x128xf32>
    %65 = vector.extract_strided_slice %1 {offsets = [12, 0], sizes = [1, 128], strides = [1, 1]} : vector<16x128xf32> to vector<1x128xf32>
    %cst_17 = arith.constant dense<0.000000e+00> : vector<8xf32>
    %66 = vector.multi_reduction <add>, %63, %cst_17 [1] : vector<8x128xf32> to vector<8xf32>
    %67 = vector.shape_cast %66 : vector<8xf32> to vector<8x1xf32>
    %cst_18 = arith.constant 3.125000e-02 : f32
    %68 = vector.broadcast %cst_18 : f32 to vector<8x1xf32>
    %69 = arith.mulf %67, %68 : vector<8x1xf32>
    %70 = vector.broadcast %69 : vector<8x1xf32> to vector<8x128xf32>
    %71 = arith.subf %63, %70 : vector<8x128xf32>
    %72 = vector.broadcast %6 : vector<1x128xf32> to vector<8x128xf32>
    %73 = arith.mulf %71, %72 : vector<8x128xf32>
    %74 = arith.mulf %73, %73 : vector<8x128xf32>
    %cst_19 = arith.constant dense<0.000000e+00> : vector<8xf32>
    %75 = vector.multi_reduction <add>, %74, %cst_19 [1] : vector<8x128xf32> to vector<8xf32>
    %76 = vector.shape_cast %75 : vector<8xf32> to vector<8x1xf32>
    %cst_20 = arith.constant 3.125000e-02 : f32
    %77 = vector.broadcast %cst_20 : f32 to vector<8x1xf32>
    %78 = arith.mulf %76, %77 : vector<8x1xf32>
    %cst_21 = arith.constant 1.000000e-01 : f32
    %79 = vector.broadcast %cst_21 : f32 to vector<8x1xf32>
    %80 = arith.addf %78, %79 : vector<8x1xf32>
    %81 = math.rsqrt %80 : vector<8x1xf32>
    %82 = vector.broadcast %81 : vector<8x1xf32> to vector<8x128xf32>
    %83 = arith.mulf %73, %82 : vector<8x128xf32>
    %84 = vector.broadcast %64 : vector<1x128xf32> to vector<8x128xf32>
    %85 = arith.mulf %83, %84 : vector<8x128xf32>
    %86 = vector.broadcast %65 : vector<1x128xf32> to vector<8x128xf32>
    %87 = arith.addf %85, %86 : vector<8x128xf32>
    %88 = arith.addf %49, %87 : vector<8x128xf32>
    %89 = arith.truncf %87 : vector<8x128xf32> to vector<8x128xbf16>
    %c2 = arith.constant 2 : index
    %c0_22 = arith.constant 0 : index
    %c0_23 = arith.constant 0 : index
    %90 = vector.load %arg2[%c2, %c0_22, %c0_23] : memref<6x128x128xbf16, #tpu.memory_space<vmem>>, vector<1x128x128xbf16>
    %91 = vector.shape_cast %90 : vector<1x128x128xbf16> to vector<128x128xbf16>
    %cst_24 = arith.constant dense<0.000000e+00> : vector<8x128xf32>
    %92 = tpu.matmul %89, %91, %cst_24 {dimension_numbers = #tpu.dot_dimension_numbers<[1], [0], [0], [1], [0, 0, 1, 1], [], []>} : vector<8x128xbf16>, vector<128x128xbf16>, vector<8x128xf32> -> vector<8x128xf32>
    %93 = vector.extract_strided_slice %1 {offsets = [2, 0], sizes = [1, 128], strides = [1, 1]} : vector<16x128xf32> to vector<1x128xf32>
    %94 = vector.broadcast %93 : vector<1x128xf32> to vector<8x128xf32>
    %95 = arith.addf %92, %94 : vector<8x128xf32>
    %96 = arith.addf %95, %88 : vector<8x128xf32>
    %97 = arith.negf %96 : vector<8x128xf32>
    %98 = math.exp %97 : vector<8x128xf32>
    %cst_25 = arith.constant 1.000000e+00 : f32
    %99 = vector.broadcast %cst_25 : f32 to vector<8x128xf32>
    %100 = arith.addf %99, %98 : vector<8x128xf32>
    %101 = arith.divf %99, %100 : vector<8x128xf32>
    %102 = arith.mulf %96, %101 : vector<8x128xf32>
    %103 = vector.extract_strided_slice %1 {offsets = [8, 0], sizes = [1, 128], strides = [1, 1]} : vector<16x128xf32> to vector<1x128xf32>
    %104 = vector.extract_strided_slice %1 {offsets = [13, 0], sizes = [1, 128], strides = [1, 1]} : vector<16x128xf32> to vector<1x128xf32>
    %cst_26 = arith.constant dense<0.000000e+00> : vector<8xf32>
    %105 = vector.multi_reduction <add>, %102, %cst_26 [1] : vector<8x128xf32> to vector<8xf32>
    %106 = vector.shape_cast %105 : vector<8xf32> to vector<8x1xf32>
    %cst_27 = arith.constant 3.125000e-02 : f32
    %107 = vector.broadcast %cst_27 : f32 to vector<8x1xf32>
    %108 = arith.mulf %106, %107 : vector<8x1xf32>
    %109 = vector.broadcast %108 : vector<8x1xf32> to vector<8x128xf32>
    %110 = arith.subf %102, %109 : vector<8x128xf32>
    %111 = vector.broadcast %6 : vector<1x128xf32> to vector<8x128xf32>
    %112 = arith.mulf %110, %111 : vector<8x128xf32>
    %113 = arith.mulf %112, %112 : vector<8x128xf32>
    %cst_28 = arith.constant dense<0.000000e+00> : vector<8xf32>
    %114 = vector.multi_reduction <add>, %113, %cst_28 [1] : vector<8x128xf32> to vector<8xf32>
    %115 = vector.shape_cast %114 : vector<8xf32> to vector<8x1xf32>
    %cst_29 = arith.constant 3.125000e-02 : f32
    %116 = vector.broadcast %cst_29 : f32 to vector<8x1xf32>
    %117 = arith.mulf %115, %116 : vector<8x1xf32>
    %cst_30 = arith.constant 1.000000e-01 : f32
    %118 = vector.broadcast %cst_30 : f32 to vector<8x1xf32>
    %119 = arith.addf %117, %118 : vector<8x1xf32>
    %120 = math.rsqrt %119 : vector<8x1xf32>
    %121 = vector.broadcast %120 : vector<8x1xf32> to vector<8x128xf32>
    %122 = arith.mulf %112, %121 : vector<8x128xf32>
    %123 = vector.broadcast %103 : vector<1x128xf32> to vector<8x128xf32>
    %124 = arith.mulf %122, %123 : vector<8x128xf32>
    %125 = vector.broadcast %104 : vector<1x128xf32> to vector<8x128xf32>
    %126 = arith.addf %124, %125 : vector<8x128xf32>
    %127 = arith.addf %88, %126 : vector<8x128xf32>
    %128 = arith.truncf %126 : vector<8x128xf32> to vector<8x128xbf16>
    %c3 = arith.constant 3 : index
    %c0_31 = arith.constant 0 : index
    %c0_32 = arith.constant 0 : index
    %129 = vector.load %arg2[%c3, %c0_31, %c0_32] : memref<6x128x128xbf16, #tpu.memory_space<vmem>>, vector<1x128x128xbf16>
    %130 = vector.shape_cast %129 : vector<1x128x128xbf16> to vector<128x128xbf16>
    %cst_33 = arith.constant dense<0.000000e+00> : vector<8x128xf32>
    %131 = tpu.matmul %128, %130, %cst_33 {dimension_numbers = #tpu.dot_dimension_numbers<[1], [0], [0], [1], [0, 0, 1, 1], [], []>} : vector<8x128xbf16>, vector<128x128xbf16>, vector<8x128xf32> -> vector<8x128xf32>
    %132 = vector.extract_strided_slice %1 {offsets = [3, 0], sizes = [1, 128], strides = [1, 1]} : vector<16x128xf32> to vector<1x128xf32>
    %133 = vector.broadcast %132 : vector<1x128xf32> to vector<8x128xf32>
    %134 = arith.addf %131, %133 : vector<8x128xf32>
    %135 = arith.addf %134, %127 : vector<8x128xf32>
    %136 = arith.negf %135 : vector<8x128xf32>
    %137 = math.exp %136 : vector<8x128xf32>
    %cst_34 = arith.constant 1.000000e+00 : f32
    %138 = vector.broadcast %cst_34 : f32 to vector<8x128xf32>
    %139 = arith.addf %138, %137 : vector<8x128xf32>
    %140 = arith.divf %138, %139 : vector<8x128xf32>
    %141 = arith.mulf %135, %140 : vector<8x128xf32>
    %142 = vector.extract_strided_slice %1 {offsets = [9, 0], sizes = [1, 128], strides = [1, 1]} : vector<16x128xf32> to vector<1x128xf32>
    %143 = vector.extract_strided_slice %1 {offsets = [14, 0], sizes = [1, 128], strides = [1, 1]} : vector<16x128xf32> to vector<1x128xf32>
    %cst_35 = arith.constant dense<0.000000e+00> : vector<8xf32>
    %144 = vector.multi_reduction <add>, %141, %cst_35 [1] : vector<8x128xf32> to vector<8xf32>
    %145 = vector.shape_cast %144 : vector<8xf32> to vector<8x1xf32>
    %cst_36 = arith.constant 3.125000e-02 : f32
    %146 = vector.broadcast %cst_36 : f32 to vector<8x1xf32>
    %147 = arith.mulf %145, %146 : vector<8x1xf32>
    %148 = vector.broadcast %147 : vector<8x1xf32> to vector<8x128xf32>
    %149 = arith.subf %141, %148 : vector<8x128xf32>
    %150 = vector.broadcast %6 : vector<1x128xf32> to vector<8x128xf32>
    %151 = arith.mulf %149, %150 : vector<8x128xf32>
    %152 = arith.mulf %151, %151 : vector<8x128xf32>
    %cst_37 = arith.constant dense<0.000000e+00> : vector<8xf32>
    %153 = vector.multi_reduction <add>, %152, %cst_37 [1] : vector<8x128xf32> to vector<8xf32>
    %154 = vector.shape_cast %153 : vector<8xf32> to vector<8x1xf32>
    %cst_38 = arith.constant 3.125000e-02 : f32
    %155 = vector.broadcast %cst_38 : f32 to vector<8x1xf32>
    %156 = arith.mulf %154, %155 : vector<8x1xf32>
    %cst_39 = arith.constant 1.000000e-01 : f32
    %157 = vector.broadcast %cst_39 : f32 to vector<8x1xf32>
    %158 = arith.addf %156, %157 : vector<8x1xf32>
    %159 = math.rsqrt %158 : vector<8x1xf32>
    %160 = vector.broadcast %159 : vector<8x1xf32> to vector<8x128xf32>
    %161 = arith.mulf %151, %160 : vector<8x128xf32>
    %162 = vector.broadcast %142 : vector<1x128xf32> to vector<8x128xf32>
    %163 = arith.mulf %161, %162 : vector<8x128xf32>
    %164 = vector.broadcast %143 : vector<1x128xf32> to vector<8x128xf32>
    %165 = arith.addf %163, %164 : vector<8x128xf32>
    %166 = arith.addf %127, %165 : vector<8x128xf32>
    %167 = arith.truncf %165 : vector<8x128xf32> to vector<8x128xbf16>
    %c4 = arith.constant 4 : index
    %c0_40 = arith.constant 0 : index
    %c0_41 = arith.constant 0 : index
    %168 = vector.load %arg2[%c4, %c0_40, %c0_41] : memref<6x128x128xbf16, #tpu.memory_space<vmem>>, vector<1x128x128xbf16>
    %169 = vector.shape_cast %168 : vector<1x128x128xbf16> to vector<128x128xbf16>
    %cst_42 = arith.constant dense<0.000000e+00> : vector<8x128xf32>
    %170 = tpu.matmul %167, %169, %cst_42 {dimension_numbers = #tpu.dot_dimension_numbers<[1], [0], [0], [1], [0, 0, 1, 1], [], []>} : vector<8x128xbf16>, vector<128x128xbf16>, vector<8x128xf32> -> vector<8x128xf32>
    %171 = vector.extract_strided_slice %1 {offsets = [4, 0], sizes = [1, 128], strides = [1, 1]} : vector<16x128xf32> to vector<1x128xf32>
    %172 = vector.broadcast %171 : vector<1x128xf32> to vector<8x128xf32>
    %173 = arith.addf %170, %172 : vector<8x128xf32>
    %174 = arith.addf %173, %166 : vector<8x128xf32>
    %175 = arith.negf %174 : vector<8x128xf32>
    %176 = math.exp %175 : vector<8x128xf32>
    %cst_43 = arith.constant 1.000000e+00 : f32
    %177 = vector.broadcast %cst_43 : f32 to vector<8x128xf32>
    %178 = arith.addf %177, %176 : vector<8x128xf32>
    %179 = arith.divf %177, %178 : vector<8x128xf32>
    %180 = arith.mulf %174, %179 : vector<8x128xf32>
    %181 = vector.extract_strided_slice %1 {offsets = [10, 0], sizes = [1, 128], strides = [1, 1]} : vector<16x128xf32> to vector<1x128xf32>
    %182 = vector.extract_strided_slice %1 {offsets = [15, 0], sizes = [1, 128], strides = [1, 1]} : vector<16x128xf32> to vector<1x128xf32>
    %cst_44 = arith.constant dense<0.000000e+00> : vector<8xf32>
    %183 = vector.multi_reduction <add>, %180, %cst_44 [1] : vector<8x128xf32> to vector<8xf32>
    %184 = vector.shape_cast %183 : vector<8xf32> to vector<8x1xf32>
    %cst_45 = arith.constant 3.125000e-02 : f32
    %185 = vector.broadcast %cst_45 : f32 to vector<8x1xf32>
    %186 = arith.mulf %184, %185 : vector<8x1xf32>
    %187 = vector.broadcast %186 : vector<8x1xf32> to vector<8x128xf32>
    %188 = arith.subf %180, %187 : vector<8x128xf32>
    %189 = vector.broadcast %6 : vector<1x128xf32> to vector<8x128xf32>
    %190 = arith.mulf %188, %189 : vector<8x128xf32>
    %191 = arith.mulf %190, %190 : vector<8x128xf32>
    %cst_46 = arith.constant dense<0.000000e+00> : vector<8xf32>
    %192 = vector.multi_reduction <add>, %191, %cst_46 [1] : vector<8x128xf32> to vector<8xf32>
    %193 = vector.shape_cast %192 : vector<8xf32> to vector<8x1xf32>
    %cst_47 = arith.constant 3.125000e-02 : f32
    %194 = vector.broadcast %cst_47 : f32 to vector<8x1xf32>
    %195 = arith.mulf %193, %194 : vector<8x1xf32>
    %cst_48 = arith.constant 1.000000e-01 : f32
    %196 = vector.broadcast %cst_48 : f32 to vector<8x1xf32>
    %197 = arith.addf %195, %196 : vector<8x1xf32>
    %198 = math.rsqrt %197 : vector<8x1xf32>
    %199 = vector.broadcast %198 : vector<8x1xf32> to vector<8x128xf32>
    %200 = arith.mulf %190, %199 : vector<8x128xf32>
    %201 = vector.broadcast %181 : vector<1x128xf32> to vector<8x128xf32>
    %202 = arith.mulf %200, %201 : vector<8x128xf32>
    %203 = vector.broadcast %182 : vector<1x128xf32> to vector<8x128xf32>
    %204 = arith.addf %202, %203 : vector<8x128xf32>
    %205 = arith.truncf %204 : vector<8x128xf32> to vector<8x128xbf16>
    %c5 = arith.constant 5 : index
    %c0_49 = arith.constant 0 : index
    %c0_50 = arith.constant 0 : index
    %206 = vector.load %arg2[%c5, %c0_49, %c0_50] : memref<6x128x128xbf16, #tpu.memory_space<vmem>>, vector<1x128x128xbf16>
    %207 = vector.shape_cast %206 : vector<1x128x128xbf16> to vector<128x128xbf16>
    %cst_51 = arith.constant dense<0.000000e+00> : vector<8x128xf32>
    %208 = tpu.matmul %205, %207, %cst_51 {dimension_numbers = #tpu.dot_dimension_numbers<[1], [0], [0], [1], [0, 0, 1, 1], [], []>} : vector<8x128xbf16>, vector<128x128xbf16>, vector<8x128xf32> -> vector<8x128xf32>
    %209 = vector.extract_strided_slice %1 {offsets = [5, 0], sizes = [1, 128], strides = [1, 1]} : vector<16x128xf32> to vector<1x128xf32>
    %210 = vector.broadcast %209 : vector<1x128xf32> to vector<8x128xf32>
    %211 = arith.addf %208, %210 : vector<8x128xf32>
    %c0_52 = arith.constant 0 : index
    %c0_53 = arith.constant 0 : index
    %212 = vector.load %arg4[%c0_52, %c0_53] : memref<8x128xf32, #tpu.memory_space<vmem>>, vector<8x128xf32>
    tpu.vector_store %arg4[%c0_52, %c0_53], %211 {strides = array<i32>} : memref<8x128xf32, #tpu.memory_space<vmem>>, vector<8x128xf32>,
    return
  }
  func.func @transform_0(%arg0: i32) -> (i32, i32) {
    %c0_i32 = arith.constant 0 : i32
    %c0_i32_0 = arith.constant 0 : i32
    return %arg0, %c0_i32 : i32, i32
  }
  func.func @transform_1(%arg0: i32) -> (i32, i32, i32) {
    %c0_i32 = arith.constant 0 : i32
    %c0_i32_0 = arith.constant 0 : i32
    %c0_i32_1 = arith.constant 0 : i32
    %c0_i32_2 = arith.constant 0 : i32
    return %c0_i32, %c0_i32_0, %c0_i32_1 : i32, i32, i32
  }
  func.func @transform_2(%arg0: i32) -> (i32, i32) {
    %c0_i32 = arith.constant 0 : i32
    %c0_i32_0 = arith.constant 0 : i32
    %c0_i32_1 = arith.constant 0 : i32
    return %c0_i32, %c0_i32_0 : i32, i32
  }
  func.func @transform_3(%arg0: i32) -> (i32, i32) {
    %c0_i32 = arith.constant 0 : i32
    %c0_i32_0 = arith.constant 0 : i32
    return %arg0, %c0_i32 : i32, i32
  }
}

</mosaic_0001>

<llo_original>
// kernel: tpu_custom_call.1
$region0: #{tpu_custom_call.1}
  #allocation0 [shape = 'u32[]', space=smem, size = 0x4, offset = 0x4, fixed_abs, tag = 'smem constant byte address 0x4 - core index']
  #allocation1 [shape = 'u32[72,128]{1,0:T(1,128)}', space=vmem, size = 0x9000, scoped, tag = 'internal scratch']
  %s0 = inlined_call_operand.hbm [shape: f32[8,128], index: 0, kind: input, shape index: {}]
  %s1 = inlined_call_operand.hbm [shape: bf16[6,128,128], index: 1, kind: input, shape index: {}]
  %s2 = inlined_call_operand.hbm [shape: f32[16,128], index: 2, kind: input, shape index: {}]
  %s3 = inlined_call_operand.hbm [shape: f32[8,128], index: 3, kind: output, shape index: {}]
  %s4 = sld [smem:[#allocation0]]
  $region34: #{tpu_custom_call.1} parent=0
    _
  %s6 = ssub.s32 1, %s4
  %s7 = scalar_select 0, %s6, %s4
  $region1: #{tpu_custom_call.1} parent=0
    #allocation2 [shape = 'u8[4096]{0}', space=vmem, size = 0x1000, scoped, tag = 'input window, operand 0, single buffered']
    #allocation3 [shape = 's32[1]{0}', space=sflag, size = 0x4, scoped, tag = 'scoped memory for tpu_custom_call.1']
    #allocation4 [shape = 's32[1]{0}', space=sflag, size = 0x4, scoped, tag = 'scoped memory for tpu_custom_call.1']
    #allocation5 [shape = 'u8[196608]{0}', space=vmem, size = 0x30000, scoped, tag = 'input window, operand 1, single buffered']
    #allocation6 [shape = 's32[1]{0}', space=sflag, size = 0x4, scoped, tag = 'scoped memory for tpu_custom_call.1']
    #allocation7 [shape = 'u8[8192]{0}', space=vmem, size = 0x2000, scoped, tag = 'input window, operand 2, single buffered']
    #allocation8 [shape = 'u8[4096]{0}', space=vmem, size = 0x1000, scoped, tag = 'output window, operand 0, single buffered']
    %8 = vsyncpa [#allocation3], 0
    %9 = vsyncpa [#allocation6], 0
    %10 = vsyncpa [#allocation4], 0
    // Predicated region
    $region2: #{tpu_custom_call.1} parent=1 // pred_check
      _
    $region3: #{tpu_custom_call.1} parent=1 // pred_check_branch
      %12 = sbr.rel (0) target = $region5
    $region4: #{tpu_custom_call.1} parent=1 // pred_region
      %14 = vsyncadd [#allocation3], 0
      %s16 = sshll.u32 %s0, 4
      %s17 = int_to_ptr.hbm [resolvable:$true] %s16
      %s18 = sshll.u32 [#allocation2], 4
      %s19 = int_to_ptr.vmem [resolvable:$true] %s18
      %21 = dma.hbm_to_vmem [thread:$0]  %s17, 128, %s19, [#allocation3]
    $region5: #{tpu_custom_call.1} parent=1 // pred_fallthru
      _
    // Predicated region
    $region6: #{tpu_custom_call.1} parent=1 // pred_check
      _
    $region7: #{tpu_custom_call.1} parent=1 // pred_check_branch
      %23 = sbr.rel (0) target = $region9
    $region8: #{tpu_custom_call.1} parent=1 // pred_region
      %25 = vsyncadd [#allocation6], 0
      %s26 = sshll.u32 %s1, 4
      %s27 = int_to_ptr.hbm [resolvable:$true] %s26
      %s28 = sshll.u32 [#allocation5], 4
      %s29 = int_to_ptr.vmem [resolvable:$true] %s28
      %34 = dma.hbm_to_vmem [thread:$0]  %s27, 6144, %s29, [#allocation6], 64, 64, 4
    $region9: #{tpu_custom_call.1} parent=1 // pred_fallthru
      _
    // Predicated region
    $region10: #{tpu_custom_call.1} parent=1 // pred_check
      _
    $region11: #{tpu_custom_call.1} parent=1 // pred_check_branch
      %36 = sbr.rel (0) target = $region13
    $region12: #{tpu_custom_call.1} parent=1 // pred_region
      %38 = vsyncadd [#allocation6], 0
      %s39 = sshll.u32 %s2, 4
      %s40 = int_to_ptr.hbm [resolvable:$true] %s39
      %s41 = sshll.u32 [#allocation7], 4
      %s42 = int_to_ptr.vmem [resolvable:$true] %s41
      %47 = dma.hbm_to_vmem [thread:$0]  %s40, 256, %s42, [#allocation6], 128, 128, 8
    $region13: #{tpu_custom_call.1} parent=1 // pred_fallthru
      _
    // Predicated region
    $region14: #{tpu_custom_call.1} parent=1 // pred_check
      _
    $region15: #{tpu_custom_call.1} parent=1 // pred_check_branch
      %49 = sbr.rel (0) target = $region17
    $region16: #{tpu_custom_call.1} parent=1 // pred_region
      %51 = dma.done [#allocation3], 128
    $region17: #{tpu_custom_call.1} parent=1 // pred_fallthru
      _
    // Predicated region
    $region18: #{tpu_custom_call.1} parent=1 // pred_check
      _
    $region19: #{tpu_custom_call.1} parent=1 // pred_check_branch
      %53 = sbr.rel (0) target = $region21
    $region20: #{tpu_custom_call.1} parent=1 // pred_region
      %55 = dma.done [#allocation6], 6144
    $region21: #{tpu_custom_call.1} parent=1 // pred_fallthru
      _
    // Predicated region
    $region22: #{tpu_custom_call.1} parent=1 // pred_check
      _
    $region23: #{tpu_custom_call.1} parent=1 // pred_check_branch
      %57 = sbr.rel (0) target = $region25
    $region24: #{tpu_custom_call.1} parent=1 // pred_region
      %59 = dma.done [#allocation6], 256
    $region25: #{tpu_custom_call.1} parent=1 // pred_fallthru
      _
    %v60 = vld [vmem:[#allocation2] sm:$0xff]
    %v61 = vld [vmem:[#allocation7] sm:$0xff]
    %v62 = vld [vmem:[#allocation7 + $0x8] sm:$0xff]
    %v63 = vlaneseq
    %v64 = vand.u32 %v63, 127
    %vm65 = vcmp.lt.s32.totalorder %v64, 32
    %v66 = vsel %vm65, 1, 0
    %v67 = vcvt.s32.f32 %v66
    %v68 = vmul.f32 %v60, %v60
    %69 = vadd.xlane.f32.xlu0 %v68
    %v70 = vpop.xlane.xlu0 %69
    %v71 = vrsqrt.pop %v70
    %v72 = vmul.f32 %v71, %v70
    %v73 = vmul.f32 %v72, %v71
    %v74 = vmul.f32 0.5, %v73
    %v75 = vsub.f32 1.5, %v74
    %v76 = vmul.f32 %v71, %v75
    %vm77 = vweird.f32 %v70
    %vm78 = vweird.f32 %v71
    %vm79 = vmor %vm77, %vm78
    %v80 = vsel %vm79, %v71, %v76
    %v81 = vmul.f32 %v60, %v80
    %v82 = vpack.c.bf16 %v81, %v81
    %v83 = vld [vmem:[#allocation5] sm:$0xf]
    %v84 = vld [vmem:[#allocation5 + $0x4] sm:$0xf]
    %v85 = vld [vmem:[#allocation5 + $0x8] sm:$0xf]
    %v86 = vld [vmem:[#allocation5 + $0xc] sm:$0xf]
    %v87 = vld [vmem:[#allocation5 + $0x10] sm:$0xf]
    %v88 = vld [vmem:[#allocation5 + $0x14] sm:$0xf]
    %v89 = vld [vmem:[#allocation5 + $0x18] sm:$0xf]
    %v90 = vld [vmem:[#allocation5 + $0x1c] sm:$0xf]
    %v91 = vld [vmem:[#allocation5 + $0x20] sm:$0xf]
    %v92 = vld [vmem:[#allocation5 + $0x24] sm:$0xf]
    %v93 = vld [vmem:[#allocation5 + $0x28] sm:$0xf]
    %v94 = vld [vmem:[#allocation5 + $0x2c] sm:$0xf]
    %v95 = vld [vmem:[#allocation5 + $0x30] sm:$0xf]
    %v96 = vld [vmem:[#allocation5 + $0x34] sm:$0xf]
    %v97 = vld [vmem:[#allocation5 + $0x38] sm:$0xf]
    %v98 = vld [vmem:[#allocation5 + $0x3c] sm:$0xf]
    %v99 = vperm.slane %v61, 0
    %v116 = vunpack.c.l.b16 %v83
    %v117 = vunpack.c.l.b16 %v84
    %v118 = vunpack.c.l.b16 %v85
    %v119 = vunpack.c.l.b16 %v86
    %v120 = vunpack.c.l.b16 %v87
    %v121 = vunpack.c.l.b16 %v88
    %v122 = vunpack.c.l.b16 %v89
    %v123 = vunpack.c.l.b16 %v90
    %v124 = vunpack.c.l.b16 %v91
    %v125 = vunpack.c.l.b16 %v92
    %v126 = vunpack.c.l.b16 %v93
    %v127 = vunpack.c.l.b16 %v94
    %v128 = vunpack.c.l.b16 %v95
    %v129 = vunpack.c.l.b16 %v96
    %v130 = vunpack.c.l.b16 %v97
    %v131 = vunpack.c.l.b16 %v98
    %v132 = vpack.c.b16 %v117, %v116
    %v133 = vpack.c.b16 %v119, %v118
    %v134 = vpack.c.b16 %v121, %v120
    %v135 = vpack.c.b16 %v123, %v122
    %v136 = vpack.c.b16 %v125, %v124
    %v137 = vpack.c.b16 %v127, %v126
    %v138 = vpack.c.b16 %v129, %v128
    %v139 = vpack.c.b16 %v131, %v130
    %148 = vmatpush.bf16.msra.mxu0 %v139
    %149 = vmatpush.bf16.msra.mxu0 %v138
    %150 = vmatpush.bf16.msra.mxu0 %v137
    %151 = vmatpush.bf16.msra.mxu0 %v136
    %152 = vmatpush.bf16.msra.mxu0 %v135
    %153 = vmatpush.bf16.msra.mxu0 %v134
    %154 = vmatpush.bf16.msra.mxu0 %v133
    %155 = vmatpush.bf16.msra.mxu0 %v132
    %156 = vmatmul.bf16.gmra.mxu0 %v82
    %v157 = vpop.f32.mrf.mxu0
    %v158 = vadd.f32 %v99, %v157
    %v159 = vpop.f32.mrf.mxu0
    %160 = vdwg.mxu0
    %v161 = vxor.u32 %v158, 2147483648
    %v162 = vmul.f32 %v161, 1.442695
    %v163 = vpow.pop %v162
    %v164 = vadd.f32 %v163, 1.0
    %v165 = vrcp.pop %v164
    %v166 = vmul.f32 %v164, %v165
    %v167 = vsub.f32 1.0, %v166
    %v168 = vmul.f32 %v165, %v167
    %v169 = vadd.f32 %v165, %v168
    %vm170 = vweird.f32 %v164
    %vm171 = vweird.f32 %v165
    %vm172 = vmor %vm170, %vm171
    %v173 = vsel %vm172, %v165, %v169
    %v174 = vand.u32 2147483647, %v164
    %vm175 = vcmp.eq.f32.partialorder %v174, 8.507059e+37
    %v176 = vand.u32 %v164, 2147483648
    %v177 = vor.u32 1.1754944e-38, %v176
    %v178 = vsel %vm175, %v177, %v173
    %v179 = vmul.f32 1.0, %v178
    %v180 = vmul.f32 %v158, %v179
    %181 = vadd.xlane.f32.xlu0 %v180
    %v182 = vpop.xlane.xlu0 %181
    %v183 = vmul.f32 %v182, 0.03125
    %v184 = vsub.f32 %v180, %v183
    %v185 = vmul.f32 %v184, %v67
    %v186 = vmul.f32 %v185, %v185
    %187 = vadd.xlane.f32.xlu0 %v186
    %v188 = vpop.xlane.xlu0 %187
    %v189 = vmul.f32 %v188, 0.03125
    %v190 = vadd.f32 %v189, 0.1
    %v191 = vrsqrt.pop %v190
    %v192 = vmul.f32 %v191, %v190
    %v193 = vmul.f32 %v192, %v191
    %v194 = vmul.f32 0.5, %v193
    %v195 = vsub.f32 1.5, %v194
    %v196 = vmul.f32 %v191, %v195
    %vm197 = vweird.f32 %v190
    %vm198 = vweird.f32 %v191
    %vm199 = vmor %vm197, %vm198
    %v200 = vsel %vm199, %v191, %v196
    %v201 = vmul.f32 %v185, %v200
    %v202 = vperm.slane %v61, 6
    %v203 = vmul.f32 %v201, %v202
    %v204 = vperm.slane %v62, 3
    %v205 = vadd.f32 %v203, %v204
    %v206 = vpack.c.bf16 %v205, %v205
    %s207 = scalar_lea.vmem [#allocation5], 64
    %v208 = vld [vmem:[%s207] sm:$0xf]
    %v209 = vld [vmem:[%s207 + $0x4] sm:$0xf]
    %v210 = vld [vmem:[%s207 + $0x8] sm:$0xf]
    %v211 = vld [vmem:[%s207 + $0xc] sm:$0xf]
    %v212 = vld [vmem:[%s207 + $0x10] sm:$0xf]
    %v213 = vld [vmem:[%s207 + $0x14] sm:$0xf]
    %v214 = vld [vmem:[%s207 + $0x18] sm:$0xf]
    %v215 = vld [vmem:[%s207 + $0x1c] sm:$0xf]
    %v216 = vld [vmem:[%s207 + $0x20] sm:$0xf]
    %v217 = vld [vmem:[%s207 + $0x24] sm:$0xf]
    %v218 = vld [vmem:[%s207 + $0x28] sm:$0xf]
    %v219 = vld [vmem:[%s207 + $0x2c] sm:$0xf]
    %v220 = vld [vmem:[%s207 + $0x30] sm:$0xf]
    %v221 = vld [vmem:[%s207 + $0x34] sm:$0xf]
    %v222 = vld [vmem:[%s207 + $0x38] sm:$0xf]
    %v223 = vld [vmem:[%s207 + $0x3c] sm:$0xf]
    %v224 = vperm.slane %v61, 1
    %v241 = vunpack.c.l.b16 %v208
    %v242 = vunpack.c.l.b16 %v209
    %v243 = vunpack.c.l.b16 %v210
    %v244 = vunpack.c.l.b16 %v211
    %v245 = vunpack.c.l.b16 %v212
    %v246 = vunpack.c.l.b16 %v213
    %v247 = vunpack.c.l.b16 %v214
    %v248 = vunpack.c.l.b16 %v215
    %v249 = vunpack.c.l.b16 %v216
    %v250 = vunpack.c.l.b16 %v217
    %v251 = vunpack.c.l.b16 %v218
    %v252 = vunpack.c.l.b16 %v219
    %v253 = vunpack.c.l.b16 %v220
    %v254 = vunpack.c.l.b16 %v221
    %v255 = vunpack.c.l.b16 %v222
    %v256 = vunpack.c.l.b16 %v223
    %v257 = vpack.c.b16 %v242, %v241
    %v258 = vpack.c.b16 %v244, %v243
    %v259 = vpack.c.b16 %v246, %v245
    %v260 = vpack.c.b16 %v248, %v247
    %v261 = vpack.c.b16 %v250, %v249
    %v262 = vpack.c.b16 %v252, %v251
    %v263 = vpack.c.b16 %v254, %v253
    %v264 = vpack.c.b16 %v256, %v255
    %273 = vmatpush.bf16.msra.mxu0 %v264
    %274 = vmatpush.bf16.msra.mxu0 %v263
    %275 = vmatpush.bf16.msra.mxu0 %v262
    %276 = vmatpush.bf16.msra.mxu0 %v261
    %277 = vmatpush.bf16.msra.mxu0 %v260
    %278 = vmatpush.bf16.msra.mxu0 %v259
    %279 = vmatpush.bf16.msra.mxu0 %v258
    %280 = vmatpush.bf16.msra.mxu0 %v257
    %281 = vmatmul.bf16.gmra.mxu0 %v206
    %v282 = vpop.f32.mrf.mxu0
    %v283 = vadd.f32 %v224, %v282
    %v284 = vpop.f32.mrf.mxu0
    %285 = vdwg.mxu0
    %v286 = vadd.f32 %v283, %v205
    %v287 = vxor.u32 %v286, 2147483648
    %v288 = vmul.f32 %v287, 1.442695
    %v289 = vpow.pop %v288
    %v290 = vadd.f32 %v289, 1.0
    %v291 = vrcp.pop %v290
    %v292 = vmul.f32 %v290, %v291
    %v293 = vsub.f32 1.0, %v292
    %v294 = vmul.f32 %v291, %v293
    %v295 = vadd.f32 %v291, %v294
    %vm296 = vweird.f32 %v290
    %vm297 = vweird.f32 %v291
    %vm298 = vmor %vm296, %vm297
    %v299 = vsel %vm298, %v291, %v295
    %v300 = vand.u32 2147483647, %v290
    %vm301 = vcmp.eq.f32.partialorder %v300, 8.507059e+37
    %v302 = vand.u32 %v290, 2147483648
    %v303 = vor.u32 1.1754944e-38, %v302
    %v304 = vsel %vm301, %v303, %v299
    %v305 = vmul.f32 1.0, %v304
    %v306 = vmul.f32 %v286, %v305
    %307 = vadd.xlane.f32.xlu0 %v306
    %v308 = vpop.xlane.xlu0 %307
    %v309 = vmul.f32 %v308, 0.03125
    %v310 = vsub.f32 %v306, %v309
    %v311 = vmul.f32 %v310, %v67
    %v312 = vmul.f32 %v311, %v311
    %313 = vadd.xlane.f32.xlu0 %v312
    %v314 = vpop.xlane.xlu0 %313
    %v315 = vmul.f32 %v314, 0.03125
    %v316 = vadd.f32 %v315, 0.1
    %v317 = vrsqrt.pop %v316
    %v318 = vmul.f32 %v317, %v316
    %v319 = vmul.f32 %v318, %v317
    %v320 = vmul.f32 0.5, %v319
    %v321 = vsub.f32 1.5, %v320
    %v322 = vmul.f32 %v317, %v321
    %vm323 = vweird.f32 %v316
    %vm324 = vweird.f32 %v317
    %vm325 = vmor %vm323, %vm324
    %v326 = vsel %vm325, %v317, %v322
    %v327 = vmul.f32 %v311, %v326
    %v328 = vperm.slane %v61, 7
    %v329 = vmul.f32 %v327, %v328
    %v330 = vperm.slane %v62, 4
    %v331 = vadd.f32 %v329, %v330
    %v332 = vadd.f32 %v205, %v331
    %v333 = vpack.c.bf16 %v331, %v331
    %s334 = scalar_lea.vmem [#allocation5], 128
    %v335 = vld [vmem:[%s334] sm:$0xf]
    %v336 = vld [vmem:[%s334 + $0x4] sm:$0xf]
    %v337 = vld [vmem:[%s334 + $0x8] sm:$0xf]
    %v338 = vld [vmem:[%s334 + $0xc] sm:$0xf]
    %v339 = vld [vmem:[%s334 + $0x10] sm:$0xf]
    %v340 = vld [vmem:[%s334 + $0x14] sm:$0xf]
    %v341 = vld [vmem:[%s334 + $0x18] sm:$0xf]
    %v342 = vld [vmem:[%s334 + $0x1c] sm:$0xf]
    %v343 = vld [vmem:[%s334 + $0x20] sm:$0xf]
    %v344 = vld [vmem:[%s334 + $0x24] sm:$0xf]
    %v345 = vld [vmem:[%s334 + $0x28] sm:$0xf]
    %v346 = vld [vmem:[%s334 + $0x2c] sm:$0xf]
    %v347 = vld [vmem:[%s334 + $0x30] sm:$0xf]
    %v348 = vld [vmem:[%s334 + $0x34] sm:$0xf]
    %v349 = vld [vmem:[%s334 + $0x38] sm:$0xf]
    %v350 = vld [vmem:[%s334 + $0x3c] sm:$0xf]
    %v351 = vperm.slane %v61, 2
    %v368 = vunpack.c.l.b16 %v335
    %v369 = vunpack.c.l.b16 %v336
    %v370 = vunpack.c.l.b16 %v337
    %v371 = vunpack.c.l.b16 %v338
    %v372 = vunpack.c.l.b16 %v339
    %v373 = vunpack.c.l.b16 %v340
    %v374 = vunpack.c.l.b16 %v341
    %v375 = vunpack.c.l.b16 %v342
    %v376 = vunpack.c.l.b16 %v343
    %v377 = vunpack.c.l.b16 %v344
    %v378 = vunpack.c.l.b16 %v345
    %v379 = vunpack.c.l.b16 %v346
    %v380 = vunpack.c.l.b16 %v347
    %v381 = vunpack.c.l.b16 %v348
    %v382 = vunpack.c.l.b16 %v349
    %v383 = vunpack.c.l.b16 %v350
    %v384 = vpack.c.b16 %v369, %v368
    %v385 = vpack.c.b16 %v371, %v370
    %v386 = vpack.c.b16 %v373, %v372
    %v387 = vpack.c.b16 %v375, %v374
    %v388 = vpack.c.b16 %v377, %v376
    %v389 = vpack.c.b16 %v379, %v378
    %v390 = vpack.c.b16 %v381, %v380
    %v391 = vpack.c.b16 %v383, %v382
    %400 = vmatpush.bf16.msra.mxu0 %v391
    %401 = vmatpush.bf16.msra.mxu0 %v390
    %402 = vmatpush.bf16.msra.mxu0 %v389
    %403 = vmatpush.bf16.msra.mxu0 %v388
    %404 = vmatpush.bf16.msra.mxu0 %v387
    %405 = vmatpush.bf16.msra.mxu0 %v386
    %406 = vmatpush.bf16.msra.mxu0 %v385
    %407 = vmatpush.bf16.msra.mxu0 %v384
    %408 = vmatmul.bf16.gmra.mxu0 %v333
    %v409 = vpop.f32.mrf.mxu0
    %v410 = vadd.f32 %v351, %v409
    %v411 = vpop.f32.mrf.mxu0
    %412 = vdwg.mxu0
    %v413 = vadd.f32 %v410, %v332
    %v414 = vxor.u32 %v413, 2147483648
    %v415 = vmul.f32 %v414, 1.442695
    %v416 = vpow.pop %v415
    %v417 = vadd.f32 %v416, 1.0
    %v418 = vrcp.pop %v417
    %v419 = vmul.f32 %v417, %v418
    %v420 = vsub.f32 1.0, %v419
    %v421 = vmul.f32 %v418, %v420
    %v422 = vadd.f32 %v418, %v421
    %vm423 = vweird.f32 %v417
    %vm424 = vweird.f32 %v418
    %vm425 = vmor %vm423, %vm424
    %v426 = vsel %vm425, %v418, %v422
    %v427 = vand.u32 2147483647, %v417
    %vm428 = vcmp.eq.f32.partialorder %v427, 8.507059e+37
    %v429 = vand.u32 %v417, 2147483648
    %v430 = vor.u32 1.1754944e-38, %v429
    %v431 = vsel %vm428, %v430, %v426
    %v432 = vmul.f32 1.0, %v431
    %v433 = vmul.f32 %v413, %v432
    %434 = vadd.xlane.f32.xlu0 %v433
    %v435 = vpop.xlane.xlu0 %434
    %v436 = vmul.f32 %v435, 0.03125
    %v437 = vsub.f32 %v433, %v436
    %v438 = vmul.f32 %v437, %v67
    %v439 = vmul.f32 %v438, %v438
    %440 = vadd.xlane.f32.xlu0 %v439
    %v441 = vpop.xlane.xlu0 %440
    %v442 = vmul.f32 %v441, 0.03125
    %v443 = vadd.f32 %v442, 0.1
    %v444 = vrsqrt.pop %v443
    %v445 = vmul.f32 %v444, %v443
    %v446 = vmul.f32 %v445, %v444
    %v447 = vmul.f32 0.5, %v446
    %v448 = vsub.f32 1.5, %v447
    %v449 = vmul.f32 %v444, %v448
    %vm450 = vweird.f32 %v443
    %vm451 = vweird.f32 %v444
    %vm452 = vmor %vm450, %vm451
    %v453 = vsel %vm452, %v444, %v449
    %v454 = vmul.f32 %v438, %v453
    %v455 = vperm.slane %v62, 0
    %v456 = vmul.f32 %v454, %v455
    %v457 = vperm.slane %v62, 5
    %v458 = vadd.f32 %v456, %v457
    %v459 = vadd.f32 %v332, %v458
    %v460 = vpack.c.bf16 %v458, %v458
    %s461 = scalar_lea.vmem [#allocation5], 192
    %v462 = vld [vmem:[%s461] sm:$0xf]
    %v463 = vld [vmem:[%s461 + $0x4] sm:$0xf]
    %v464 = vld [vmem:[%s461 + $0x8] sm:$0xf]
    %v465 = vld [vmem:[%s461 + $0xc] sm:$0xf]
    %v466 = vld [vmem:[%s461 + $0x10] sm:$0xf]
    %v467 = vld [vmem:[%s461 + $0x14] sm:$0xf]
    %v468 = vld [vmem:[%s461 + $0x18] sm:$0xf]
    %v469 = vld [vmem:[%s461 + $0x1c] sm:$0xf]
    %v470 = vld [vmem:[%s461 + $0x20] sm:$0xf]
    %v471 = vld [vmem:[%s461 + $0x24] sm:$0xf]
    %v472 = vld [vmem:[%s461 + $0x28] sm:$0xf]
    %v473 = vld [vmem:[%s461 + $0x2c] sm:$0xf]
    %v474 = vld [vmem:[%s461 + $0x30] sm:$0xf]
    %v475 = vld [vmem:[%s461 + $0x34] sm:$0xf]
    %v476 = vld [vmem:[%s461 + $0x38] sm:$0xf]
    %v477 = vld [vmem:[%s461 + $0x3c] sm:$0xf]
    %v478 = vperm.slane %v61, 3
    %v495 = vunpack.c.l.b16 %v462
    %v496 = vunpack.c.l.b16 %v463
    %v497 = vunpack.c.l.b16 %v464
    %v498 = vunpack.c.l.b16 %v465
    %v499 = vunpack.c.l.b16 %v466
    %v500 = vunpack.c.l.b16 %v467
    %v501 = vunpack.c.l.b16 %v468
    %v502 = vunpack.c.l.b16 %v469
    %v503 = vunpack.c.l.b16 %v470
    %v504 = vunpack.c.l.b16 %v471
    %v505 = vunpack.c.l.b16 %v472
    %v506 = vunpack.c.l.b16 %v473
    %v507 = vunpack.c.l.b16 %v474
    %v508 = vunpack.c.l.b16 %v475
    %v509 = vunpack.c.l.b16 %v476
    %v510 = vunpack.c.l.b16 %v477
    %v511 = vpack.c.b16 %v496, %v495
    %v512 = vpack.c.b16 %v498, %v497
    %v513 = vpack.c.b16 %v500, %v499
    %v514 = vpack.c.b16 %v502, %v501
    %v515 = vpack.c.b16 %v504, %v503
    %v516 = vpack.c.b16 %v506, %v505
    %v517 = vpack.c.b16 %v508, %v507
    %v518 = vpack.c.b16 %v510, %v509
    %527 = vmatpush.bf16.msra.mxu0 %v518
    %528 = vmatpush.bf16.msra.mxu0 %v517
    %529 = vmatpush.bf16.msra.mxu0 %v516
    %530 = vmatpush.bf16.msra.mxu0 %v515
    %531 = vmatpush.bf16.msra.mxu0 %v514
    %532 = vmatpush.bf16.msra.mxu0 %v513
    %533 = vmatpush.bf16.msra.mxu0 %v512
    %534 = vmatpush.bf16.msra.mxu0 %v511
    %535 = vmatmul.bf16.gmra.mxu0 %v460
    %v536 = vpop.f32.mrf.mxu0
    %v537 = vadd.f32 %v478, %v536
    %v538 = vpop.f32.mrf.mxu0
    %539 = vdwg.mxu0
    %v540 = vadd.f32 %v537, %v459
    %v541 = vxor.u32 %v540, 2147483648
    %v542 = vmul.f32 %v541, 1.442695
    %v543 = vpow.pop %v542
    %v544 = vadd.f32 %v543, 1.0
    %v545 = vrcp.pop %v544
    %v546 = vmul.f32 %v544, %v545
    %v547 = vsub.f32 1.0, %v546
    %v548 = vmul.f32 %v545, %v547
    %v549 = vadd.f32 %v545, %v548
    %vm550 = vweird.f32 %v544
    %vm551 = vweird.f32 %v545
    %vm552 = vmor %vm550, %vm551
    %v553 = vsel %vm552, %v545, %v549
    %v554 = vand.u32 2147483647, %v544
    %vm555 = vcmp.eq.f32.partialorder %v554, 8.507059e+37
    %v556 = vand.u32 %v544, 2147483648
    %v557 = vor.u32 1.1754944e-38, %v556
    %v558 = vsel %vm555, %v557, %v553
    %v559 = vmul.f32 1.0, %v558
    %v560 = vmul.f32 %v540, %v559
    %561 = vadd.xlane.f32.xlu0 %v560
    %v562 = vpop.xlane.xlu0 %561
    %v563 = vmul.f32 %v562, 0.03125
    %v564 = vsub.f32 %v560, %v563
    %v565 = vmul.f32 %v564, %v67
    %v566 = vmul.f32 %v565, %v565
    %567 = vadd.xlane.f32.xlu0 %v566
    %v568 = vpop.xlane.xlu0 %567
    %v569 = vmul.f32 %v568, 0.03125
    %v570 = vadd.f32 %v569, 0.1
    %v571 = vrsqrt.pop %v570
    %v572 = vmul.f32 %v571, %v570
    %v573 = vmul.f32 %v572, %v571
    %v574 = vmul.f32 0.5, %v573
    %v575 = vsub.f32 1.5, %v574
    %v576 = vmul.f32 %v571, %v575
    %vm577 = vweird.f32 %v570
    %vm578 = vweird.f32 %v571
    %vm579 = vmor %vm577, %vm578
    %v580 = vsel %vm579, %v571, %v576
    %v581 = vmul.f32 %v565, %v580
    %v582 = vperm.slane %v62, 1
    %v583 = vmul.f32 %v581, %v582
    %v584 = vperm.slane %v62, 6
    %v585 = vadd.f32 %v583, %v584
    %v586 = vadd.f32 %v459, %v585
    %v587 = vpack.c.bf16 %v585, %v585
    %s588 = scalar_lea.vmem [#allocation5], 256
    %v589 = vld [vmem:[%s588] sm:$0xf]
    %v590 = vld [vmem:[%s588 + $0x4] sm:$0xf]
    %v591 = vld [vmem:[%s588 + $0x8] sm:$0xf]
    %v592 = vld [vmem:[%s588 + $0xc] sm:$0xf]
    %v593 = vld [vmem:[%s588 + $0x10] sm:$0xf]
    %v594 = vld [vmem:[%s588 + $0x14] sm:$0xf]
    %v595 = vld [vmem:[%s588 + $0x18] sm:$0xf]
    %v596 = vld [vmem:[%s588 + $0x1c] sm:$0xf]
    %v597 = vld [vmem:[%s588 + $0x20] sm:$0xf]
    %v598 = vld [vmem:[%s588 + $0x24] sm:$0xf]
    %v599 = vld [vmem:[%s588 + $0x28] sm:$0xf]
    %v600 = vld [vmem:[%s588 + $0x2c] sm:$0xf]
    %v601 = vld [vmem:[%s588 + $0x30] sm:$0xf]
    %v602 = vld [vmem:[%s588 + $0x34] sm:$0xf]
    %v603 = vld [vmem:[%s588 + $0x38] sm:$0xf]
    %v604 = vld [vmem:[%s588 + $0x3c] sm:$0xf]
    %v605 = vperm.slane %v61, 4
    %v622 = vunpack.c.l.b16 %v589
    %v623 = vunpack.c.l.b16 %v590
    %v624 = vunpack.c.l.b16 %v591
    %v625 = vunpack.c.l.b16 %v592
    %v626 = vunpack.c.l.b16 %v593
    %v627 = vunpack.c.l.b16 %v594
    %v628 = vunpack.c.l.b16 %v595
    %v629 = vunpack.c.l.b16 %v596
    %v630 = vunpack.c.l.b16 %v597
    %v631 = vunpack.c.l.b16 %v598
    %v632 = vunpack.c.l.b16 %v599
    %v633 = vunpack.c.l.b16 %v600
    %v634 = vunpack.c.l.b16 %v601
    %v635 = vunpack.c.l.b16 %v602
    %v636 = vunpack.c.l.b16 %v603
    %v637 = vunpack.c.l.b16 %v604
    %v638 = vpack.c.b16 %v623, %v622
    %v639 = vpack.c.b16 %v625, %v624
    %v640 = vpack.c.b16 %v627, %v626
    %v641 = vpack.c.b16 %v629, %v628
    %v642 = vpack.c.b16 %v631, %v630
    %v643 = vpack.c.b16 %v633, %v632
    %v644 = vpack.c.b16 %v635, %v634
    %v645 = vpack.c.b16 %v637, %v636
    %654 = vmatpush.bf16.msra.mxu0 %v645
    %655 = vmatpush.bf16.msra.mxu0 %v644
    %656 = vmatpush.bf16.msra.mxu0 %v643
    %657 = vmatpush.bf16.msra.mxu0 %v642
    %658 = vmatpush.bf16.msra.mxu0 %v641
    %659 = vmatpush.bf16.msra.mxu0 %v640
    %660 = vmatpush.bf16.msra.mxu0 %v639
    %661 = vmatpush.bf16.msra.mxu0 %v638
    %662 = vmatmul.bf16.gmra.mxu0 %v587
    %v663 = vpop.f32.mrf.mxu0
    %v664 = vadd.f32 %v605, %v663
    %v665 = vpop.f32.mrf.mxu0
    %666 = vdwg.mxu0
    %v667 = vadd.f32 %v664, %v586
    %v668 = vxor.u32 %v667, 2147483648
    %v669 = vmul.f32 %v668, 1.442695
    %v670 = vpow.pop %v669
    %v671 = vadd.f32 %v670, 1.0
    %v672 = vrcp.pop %v671
    %v673 = vmul.f32 %v671, %v672
    %v674 = vsub.f32 1.0, %v673
    %v675 = vmul.f32 %v672, %v674
    %v676 = vadd.f32 %v672, %v675
    %vm677 = vweird.f32 %v671
    %vm678 = vweird.f32 %v672
    %vm679 = vmor %vm677, %vm678
    %v680 = vsel %vm679, %v672, %v676
    %v681 = vand.u32 2147483647, %v671
    %vm682 = vcmp.eq.f32.partialorder %v681, 8.507059e+37
    %v683 = vand.u32 %v671, 2147483648
    %v684 = vor.u32 1.1754944e-38, %v683
    %v685 = vsel %vm682, %v684, %v680
    %v686 = vmul.f32 1.0, %v685
    %v687 = vmul.f32 %v667, %v686
    %688 = vadd.xlane.f32.xlu0 %v687
    %v689 = vpop.xlane.xlu0 %688
    %v690 = vmul.f32 %v689, 0.03125
    %v691 = vsub.f32 %v687, %v690
    %v692 = vmul.f32 %v691, %v67
    %v693 = vmul.f32 %v692, %v692
    %694 = vadd.xlane.f32.xlu0 %v693
    %v695 = vpop.xlane.xlu0 %694
    %v696 = vmul.f32 %v695, 0.03125
    %v697 = vadd.f32 %v696, 0.1
    %v698 = vrsqrt.pop %v697
    %v699 = vmul.f32 %v698, %v697
    %v700 = vmul.f32 %v699, %v698
    %v701 = vmul.f32 0.5, %v700
    %v702 = vsub.f32 1.5, %v701
    %v703 = vmul.f32 %v698, %v702
    %vm704 = vweird.f32 %v697
    %vm705 = vweird.f32 %v698
    %vm706 = vmor %vm704, %vm705
    %v707 = vsel %vm706, %v698, %v703
    %v708 = vmul.f32 %v692, %v707
    %v709 = vperm.slane %v62, 2
    %v710 = vmul.f32 %v708, %v709
    %v711 = vperm.slane %v62, 7
    %v712 = vadd.f32 %v710, %v711
    %v713 = vpack.c.bf16 %v712, %v712
    %s714 = scalar_lea.vmem [#allocation5], 320
    %v715 = vld [vmem:[%s714] sm:$0xf]
    %v716 = vld [vmem:[%s714 + $0x4] sm:$0xf]
    %v717 = vld [vmem:[%s714 + $0x8] sm:$0xf]
    %v718 = vld [vmem:[%s714 + $0xc] sm:$0xf]
    %v719 = vld [vmem:[%s714 + $0x10] sm:$0xf]
    %v720 = vld [vmem:[%s714 + $0x14] sm:$0xf]
    %v721 = vld [vmem:[%s714 + $0x18] sm:$0xf]
    %v722 = vld [vmem:[%s714 + $0x1c] sm:$0xf]
    %v723 = vld [vmem:[%s714 + $0x20] sm:$0xf]
    %v724 = vld [vmem:[%s714 + $0x24] sm:$0xf]
    %v725 = vld [vmem:[%s714 + $0x28] sm:$0xf]
    %v726 = vld [vmem:[%s714 + $0x2c] sm:$0xf]
    %v727 = vld [vmem:[%s714 + $0x30] sm:$0xf]
    %v728 = vld [vmem:[%s714 + $0x34] sm:$0xf]
    %v729 = vld [vmem:[%s714 + $0x38] sm:$0xf]
    %v730 = vld [vmem:[%s714 + $0x3c] sm:$0xf]
    %v731 = vperm.slane %v61, 5
    %v748 = vunpack.c.l.b16 %v715
    %v749 = vunpack.c.l.b16 %v716
    %v750 = vunpack.c.l.b16 %v717
    %v751 = vunpack.c.l.b16 %v718
    %v752 = vunpack.c.l.b16 %v719
    %v753 = vunpack.c.l.b16 %v720
    %v754 = vunpack.c.l.b16 %v721
    %v755 = vunpack.c.l.b16 %v722
    %v756 = vunpack.c.l.b16 %v723
    %v757 = vunpack.c.l.b16 %v724
    %v758 = vunpack.c.l.b16 %v725
    %v759 = vunpack.c.l.b16 %v726
    %v760 = vunpack.c.l.b16 %v727
    %v761 = vunpack.c.l.b16 %v728
    %v762 = vunpack.c.l.b16 %v729
    %v763 = vunpack.c.l.b16 %v730
    %v764 = vpack.c.b16 %v749, %v748
    %v765 = vpack.c.b16 %v751, %v750
    %v766 = vpack.c.b16 %v753, %v752
    %v767 = vpack.c.b16 %v755, %v754
    %v768 = vpack.c.b16 %v757, %v756
    %v769 = vpack.c.b16 %v759, %v758
    %v770 = vpack.c.b16 %v761, %v760
    %v771 = vpack.c.b16 %v763, %v762
    %780 = vmatpush.bf16.msra.mxu0 %v771
    %781 = vmatpush.bf16.msra.mxu0 %v770
    %782 = vmatpush.bf16.msra.mxu0 %v769
    %783 = vmatpush.bf16.msra.mxu0 %v768
    %784 = vmatpush.bf16.msra.mxu0 %v767
    %785 = vmatpush.bf16.msra.mxu0 %v766
    %786 = vmatpush.bf16.msra.mxu0 %v765
    %787 = vmatpush.bf16.msra.mxu0 %v764
    %788 = vmatmul.bf16.gmra.mxu0 %v713
    %v789 = vpop.f32.mrf.mxu0
    %v790 = vadd.f32 %v731, %v789
    %v791 = vpop.f32.mrf.mxu0
    %792 = vdwg.mxu0
    %793 = vst [vmem:[#allocation8] sm:$0xff] %v790
    // Predicated region
    $region26: #{tpu_custom_call.1} parent=1 // pred_check
      _
    $region27: #{tpu_custom_call.1} parent=1 // pred_check_branch
      %795 = sbr.rel (0) target = $region29
    $region28: #{tpu_custom_call.1} parent=1 // pred_region
      %797 = vsyncadd [#allocation4], 0
      %s799 = sshll.u32 [#allocation8], 4
      %s800 = int_to_ptr.vmem [resolvable:$true] %s799
      %s801 = sshll.u32 %s3, 4
      %s802 = int_to_ptr.hbm [resolvable:$true] %s801
      %804 = dma.vmem_to_hbm [thread:$0]  %s800, 128, %s802, [#allocation4]
    $region29: #{tpu_custom_call.1} parent=1 // pred_fallthru
      _
    // Predicated region
    $region30: #{tpu_custom_call.1} parent=1 // pred_check
      _
    $region31: #{tpu_custom_call.1} parent=1 // pred_check_branch
      %806 = sbr.rel (0) target = $region33
    $region32: #{tpu_custom_call.1} parent=1 // pred_region
      %808 = dma.done [#allocation4], 128
    $region33: #{tpu_custom_call.1} parent=1 // pred_fallthru
      _
    %809 = vsyncpa [#allocation3], 1
    %810 = vsyncpa [#allocation6], 1
    %811 = vsyncpa [#allocation4], 1

</llo_original>
